<compile_context>
chip_gen: v7x
topology: tpu7x:2x2x1
jax: 0.10.0
libtpu: 0.0.40
codegen_flags: <defaults>
</compile_context>

<pallas_src>
import jax
import jax.numpy as jnp
from jax.experimental import pallas as pl
from jax.experimental.pallas import tpu as pltpu

VMEM = pltpu.MemorySpace.VMEM


# ---------------------------------------------------------------------------
# Kernel: fused Linear -> BatchNorm1d (train-mode stats) -> ReLU -> Linear
# ---------------------------------------------------------------------------
def _mlp_kernel(x_ref, w1_ref, b1_ref, gamma_ref, beta_ref, w2_ref, b2_ref, o_ref):
    # Linear 1: bf16 inputs, fp32 accumulation on the MXU.
    z = jnp.dot(x_ref[...], w1_ref[...], preferred_element_type=jnp.float32)
    z = z + b1_ref[...]

    # BatchNorm1d, training-mode batch stats, single pass over z:
    # var = E[z^2] - mean^2 (biased variance, as in the PyTorch forward).
    mean = jnp.mean(z, axis=0, keepdims=True)
    ex2 = jnp.mean(z * z, axis=0, keepdims=True)
    var = ex2 - mean * mean
    z = (z - mean) * jax.lax.rsqrt(var + 1e-5)
    z = z * gamma_ref[...] + beta_ref[...]

    # ReLU
    h = jnp.maximum(z, 0.0)

    # Linear 2: cast activations to the weight dtype (bf16), accumulate in fp32.
    y = jnp.dot(h.astype(w2_ref.dtype), w2_ref[...],
                preferred_element_type=jnp.float32) + b2_ref[...]
    o_ref[...] = y.astype(o_ref.dtype)


# ---------------------------------------------------------------------------
# Wrapper: everything is tiny, lives fully in VMEM, single grid point.
# ---------------------------------------------------------------------------
def mlp_forward(x, params):
    B = x.shape[0]
    output_dim = params["w2"].shape[1]
    return pl.pallas_call(
        _mlp_kernel,
        out_shape=jax.ShapeDtypeStruct((B, output_dim), jnp.float32),
        in_specs=[pl.BlockSpec(memory_space=VMEM)] * 7,
        out_specs=pl.BlockSpec(memory_space=VMEM),
    )(
        x.astype(jnp.bfloat16),
        params["w1"].astype(jnp.bfloat16),
        params["b1"],
        params["gamma"],
        params["beta"],
        params["w2"].astype(jnp.bfloat16),
        params["b2"],
    )


# ---------------------------------------------------------------------------
# Pure-JAX fp32 reference (same training-mode BN semantics) for a sanity check.
# ---------------------------------------------------------------------------
def mlp_reference(x, params):
    z = x @ params["w1"] + params["b1"]
    mean = jnp.mean(z, axis=0, keepdims=True)
    var = jnp.mean((z - mean) ** 2, axis=0, keepdims=True)
    z = (z - mean) / jnp.sqrt(var + 1e-5)
    z = z * params["gamma"] + params["beta"]
    h = jnp.maximum(z, 0.0)
    return h @ params["w2"] + params["b2"]


# ---------------------------------------------------------------------------
# Deterministic parameter init (PyTorch nn.Linear-style uniform bounds).
# Weights are stored [in_dim, out_dim] (transposed from torch's [out, in]).
# ---------------------------------------------------------------------------
def _linear_init(key, d_in, d_out):
    kw, kb = jax.random.split(key)
    bound = 1.0 / jnp.sqrt(jnp.float32(d_in))
    w = jax.random.uniform(kw, (d_in, d_out), jnp.float32, -bound, bound)
    b = jax.random.uniform(kb, (1, d_out), jnp.float32, -bound, bound)
    return w, b


def init_params(key, input_dim, hidden_dim, output_dim):
    k1, k2 = jax.random.split(key)
    w1, b1 = _linear_init(k1, input_dim, hidden_dim)
    w2, b2 = _linear_init(k2, hidden_dim, output_dim)
    return {
        "w1": w1, "b1": b1,
        "gamma": jnp.ones((1, hidden_dim), jnp.float32),
        "beta": jnp.zeros((1, hidden_dim), jnp.float32),
        "w2": w2, "b2": b2,
    }


# ---------------------------------------------------------------------------
if __name__ == "__main__":
    B, input_dim, hidden_dim, output_dim = 16, 32, 128, 32

    key = jax.random.PRNGKey(0)
    kx, kp = jax.random.split(key)
    x = jax.random.normal(kx, (B, input_dim), jnp.float32)
    params = init_params(kp, input_dim, hidden_dim, output_dim)

    out = mlp_forward(x, params)
    out = jax.block_until_ready(out)

    assert out.shape == (B, output_dim), out.shape
    assert bool(jnp.all(jnp.isfinite(out)))

    # Loose tolerance: kernel matmuls run with bf16 inputs / fp32 accumulation.
    ref = mlp_reference(x, params)
    max_err = float(jnp.max(jnp.abs(out - ref)))
    assert max_err < 5e-2, f"max abs error {max_err}"

    print("KERNEL_OK")
</pallas_src>

<mosaic_0001>
module attributes {stable_mosaic.version = 11 : i64} {
  func.func @_mlp_kernel(%arg0: memref<16x32xbf16, #tpu.memory_space<vmem>>, %arg1: memref<32x128xbf16, #tpu.memory_space<vmem>>, %arg2: memref<1x128xf32, #tpu.memory_space<vmem>>, %arg3: memref<1x128xf32, #tpu.memory_space<vmem>>, %arg4: memref<1x128xf32, #tpu.memory_space<vmem>>, %arg5: memref<128x32xbf16, #tpu.memory_space<vmem>>, %arg6: memref<1x32xf32, #tpu.memory_space<vmem>>, %arg7: memref<16x32xf32, #tpu.memory_space<vmem>>) attributes {dimension_semantics = [], scalar_prefetch = 0 : i64, scratch_operands = 0 : i64, tpu.core_type = #tpu.core_type<tc>} {
    %c0 = arith.constant 0 : index
    %c0_0 = arith.constant 0 : index
    %0 = vector.load %arg0[%c0, %c0_0] : memref<16x32xbf16, #tpu.memory_space<vmem>>, vector<16x32xbf16>
    %c0_1 = arith.constant 0 : index
    %c0_2 = arith.constant 0 : index
    %1 = vector.load %arg1[%c0_1, %c0_2] : memref<32x128xbf16, #tpu.memory_space<vmem>>, vector<32x128xbf16>
    %cst = arith.constant dense<0.000000e+00> : vector<16x128xf32>
    %2 = tpu.matmul %0, %1, %cst {dimension_numbers = #tpu.dot_dimension_numbers<[1], [0], [0], [1], [0, 0, 1, 1], [], []>} : vector<16x32xbf16>, vector<32x128xbf16>, vector<16x128xf32> -> vector<16x128xf32>
    %c0_3 = arith.constant 0 : index
    %c0_4 = arith.constant 0 : index
    %3 = vector.load %arg2[%c0_3, %c0_4] : memref<1x128xf32, #tpu.memory_space<vmem>>, vector<1x128xf32>
    %4 = vector.broadcast %3 : vector<1x128xf32> to vector<16x128xf32>
    %5 = arith.addf %2, %4 : vector<16x128xf32>
    %cst_5 = arith.constant dense<0.000000e+00> : vector<128xf32>
    %6 = vector.multi_reduction <add>, %5, %cst_5 [0] : vector<16x128xf32> to vector<128xf32>
    %7 = vector.shape_cast %6 : vector<128xf32> to vector<1x128xf32>
    %cst_6 = arith.constant 1.600000e+01 : f32
    %8 = vector.broadcast %cst_6 : f32 to vector<1x128xf32>
    %9 = arith.divf %7, %8 : vector<1x128xf32>
    %10 = arith.mulf %5, %5 : vector<16x128xf32>
    %cst_7 = arith.constant dense<0.000000e+00> : vector<128xf32>
    %11 = vector.multi_reduction <add>, %10, %cst_7 [0] : vector<16x128xf32> to vector<128xf32>
    %12 = vector.shape_cast %11 : vector<128xf32> to vector<1x128xf32>
    %cst_8 = arith.constant 1.600000e+01 : f32
    %13 = vector.broadcast %cst_8 : f32 to vector<1x128xf32>
    %14 = arith.divf %12, %13 : vector<1x128xf32>
    %15 = arith.mulf %9, %9 : vector<1x128xf32>
    %16 = arith.subf %14, %15 : vector<1x128xf32>
    %17 = vector.broadcast %9 : vector<1x128xf32> to vector<16x128xf32>
    %18 = arith.subf %5, %17 : vector<16x128xf32>
    %cst_9 = arith.constant 9.99999974E-6 : f32
    %19 = vector.broadcast %cst_9 : f32 to vector<1x128xf32>
    %20 = arith.addf %16, %19 : vector<1x128xf32>
    %21 = math.rsqrt %20 : vector<1x128xf32>
    %22 = vector.broadcast %21 : vector<1x128xf32> to vector<16x128xf32>
    %23 = arith.mulf %18, %22 : vector<16x128xf32>
    %c0_10 = arith.constant 0 : index
    %c0_11 = arith.constant 0 : index
    %24 = vector.load %arg3[%c0_10, %c0_11] : memref<1x128xf32, #tpu.memory_space<vmem>>, vector<1x128xf32>
    %25 = vector.broadcast %24 : vector<1x128xf32> to vector<16x128xf32>
    %26 = arith.mulf %23, %25 : vector<16x128xf32>
    %c0_12 = arith.constant 0 : index
    %c0_13 = arith.constant 0 : index
    %27 = vector.load %arg4[%c0_12, %c0_13] : memref<1x128xf32, #tpu.memory_space<vmem>>, vector<1x128xf32>
    %28 = vector.broadcast %27 : vector<1x128xf32> to vector<16x128xf32>
    %29 = arith.addf %26, %28 : vector<16x128xf32>
    %cst_14 = arith.constant 0.000000e+00 : f32
    %30 = vector.broadcast %cst_14 : f32 to vector<16x128xf32>
    %31 = arith.maximumf %29, %30 : vector<16x128xf32>
    %32 = arith.truncf %31 : vector<16x128xf32> to vector<16x128xbf16>
    %c0_15 = arith.constant 0 : index
    %c0_16 = arith.constant 0 : index
    %33 = vector.load %arg5[%c0_15, %c0_16] : memref<128x32xbf16, #tpu.memory_space<vmem>>, vector<128x32xbf16>
    %cst_17 = arith.constant dense<0.000000e+00> : vector<16x32xf32>
    %34 = tpu.matmul %32, %33, %cst_17 {dimension_numbers = #tpu.dot_dimension_numbers<[1], [0], [0], [1], [0, 0, 1, 1], [], []>} : vector<16x128xbf16>, vector<128x32xbf16>, vector<16x32xf32> -> vector<16x32xf32>
    %c0_18 = arith.constant 0 : index
    %c0_19 = arith.constant 0 : index
    %35 = vector.load %arg6[%c0_18, %c0_19] : memref<1x32xf32, #tpu.memory_space<vmem>>, vector<1x32xf32>
    %36 = vector.broadcast %35 : vector<1x32xf32> to vector<16x32xf32>
    %37 = arith.addf %34, %36 : vector<16x32xf32>
    %c0_20 = arith.constant 0 : index
    %c0_21 = arith.constant 0 : index
    %38 = vector.load %arg7[%c0_20, %c0_21] : memref<16x32xf32, #tpu.memory_space<vmem>>, vector<16x32xf32>
    tpu.vector_store %arg7[%c0_20, %c0_21], %37 {strides = array<i32>} : memref<16x32xf32, #tpu.memory_space<vmem>>, vector<16x32xf32>,
    return
  }
}

</mosaic_0001>

<llo_original>
// kernel: tpu_custom_call.1
$region0: #{tpu_custom_call.1}
  #allocation0 [shape = 'u32[]', space=smem, size = 0x4, offset = 0x4, fixed_abs, tag = 'smem constant byte address 0x4 - core index']
  #allocation1 [shape = 'u32[144,128]{1,0:T(1,128)}', space=vmem, size = 0x12000, scoped, tag = 'internal scratch']
  %s0 = inlined_call_operand.vmem [shape: bf16[16,32], index: 0, kind: input, shape index: {}]
  %s1 = inlined_call_operand.vmem [shape: bf16[32,128], index: 1, kind: input, shape index: {}]
  %s2 = inlined_call_operand.vmem [shape: f32[1,128], index: 2, kind: input, shape index: {}]
  %s3 = inlined_call_operand.vmem [shape: f32[1,128], index: 3, kind: input, shape index: {}]
  %s4 = inlined_call_operand.vmem [shape: f32[1,128], index: 4, kind: input, shape index: {}]
  %s5 = inlined_call_operand.vmem [shape: bf16[128,32], index: 5, kind: input, shape index: {}]
  %s6 = inlined_call_operand.vmem [shape: f32[1,32], index: 6, kind: input, shape index: {}]
  %s7 = inlined_call_operand.hbm [shape: f32[16,32], index: 7, kind: output, shape index: {}]
  %s8 = sld [smem:[#allocation0]]
  $region38: #{tpu_custom_call.1} parent=0
    _
  %s10 = ssub.s32 1, %s8
  %s11 = scalar_select 0, %s10, %s8
  $region1: #{tpu_custom_call.1} parent=0
    #allocation2 [shape = 'u8[8192]{0}', space=vmem, size = 0x2000, scoped, tag = 'output window, operand 0, single buffered']
    #allocation3 [shape = 's32[1]{0}', space=sflag, size = 0x4, scoped, tag = 'scoped memory for tpu_custom_call.1']
    %12 = vsyncpa [#allocation3], 0
    // Predicated region
    $region2: #{tpu_custom_call.1} parent=1 // pred_check
      _
    $region3: #{tpu_custom_call.1} parent=1 // pred_check_branch
      %14 = sbr.rel (0) target = $region5
    $region4: #{tpu_custom_call.1} parent=1 // pred_region
      _
    $region5: #{tpu_custom_call.1} parent=1 // pred_fallthru
      _
    // Predicated region
    $region6: #{tpu_custom_call.1} parent=1 // pred_check
      _
    $region7: #{tpu_custom_call.1} parent=1 // pred_check_branch
      %16 = sbr.rel (0) target = $region9
    $region8: #{tpu_custom_call.1} parent=1 // pred_region
      _
    $region9: #{tpu_custom_call.1} parent=1 // pred_fallthru
      _
    // Predicated region
    $region10: #{tpu_custom_call.1} parent=1 // pred_check
      _
    $region11: #{tpu_custom_call.1} parent=1 // pred_check_branch
      %18 = sbr.rel (0) target = $region13
    $region12: #{tpu_custom_call.1} parent=1 // pred_region
      _
    $region13: #{tpu_custom_call.1} parent=1 // pred_fallthru
      _
    // Predicated region
    $region14: #{tpu_custom_call.1} parent=1 // pred_check
      _
    $region15: #{tpu_custom_call.1} parent=1 // pred_check_branch
      %20 = sbr.rel (0) target = $region17
    $region16: #{tpu_custom_call.1} parent=1 // pred_region
      _
    $region17: #{tpu_custom_call.1} parent=1 // pred_fallthru
      _
    // Predicated region
    $region18: #{tpu_custom_call.1} parent=1 // pred_check
      _
    $region19: #{tpu_custom_call.1} parent=1 // pred_check_branch
      %22 = sbr.rel (0) target = $region21
    $region20: #{tpu_custom_call.1} parent=1 // pred_region
      _
    $region21: #{tpu_custom_call.1} parent=1 // pred_fallthru
      _
    // Predicated region
    $region22: #{tpu_custom_call.1} parent=1 // pred_check
      _
    $region23: #{tpu_custom_call.1} parent=1 // pred_check_branch
      %24 = sbr.rel (0) target = $region25
    $region24: #{tpu_custom_call.1} parent=1 // pred_region
      _
    $region25: #{tpu_custom_call.1} parent=1 // pred_fallthru
      _
    // Predicated region
    $region26: #{tpu_custom_call.1} parent=1 // pred_check
      _
    $region27: #{tpu_custom_call.1} parent=1 // pred_check_branch
      %26 = sbr.rel (0) target = $region29
    $region28: #{tpu_custom_call.1} parent=1 // pred_region
      _
    $region29: #{tpu_custom_call.1} parent=1 // pred_fallthru
      _
    %v28 = vld [vmem:[%s0] sm:$0xf]
    %v29 = vld [vmem:[%s0 + $0x4] sm:$0xf]
    %v30 = vld [vmem:[%s1] sm:$0xf]
    %v31 = vld [vmem:[%s1 + $0x4] sm:$0xf]
    %v32 = vld [vmem:[%s1 + $0x8] sm:$0xf]
    %v33 = vld [vmem:[%s1 + $0xc] sm:$0xf]
    %v34 = vld [vmem:[%s2] sm:$0x1]
    %v36 = vlaneseq
    %v37 = vshrl.u32 %v36, 7
    %v38 = vsub.s32 0, %v37
    %v39 = vrot.slane %v34, %v38
    %v43 = vunpack.c.l.b16 %v28
    %v44 = vunpack.c.l.b16 %v29
    %v45 = vpack.c.b16 %v44, %v43
    %v50 = vunpack.c.l.b16 %v30
    %v51 = vunpack.c.l.b16 %v31
    %v52 = vunpack.c.l.b16 %v32
    %v53 = vunpack.c.l.b16 %v33
    %v54 = vpack.c.b16 %v51, %v50
    %v55 = vpack.c.b16 %v53, %v52
    %vm58 = vcmask 261120
    %v60 = vsel %vm58, %v45, 0
    %62 = vmatprep.subr.bf16.mxu0 0
    %63 = vmatpush1.bf16.msra.mxu0 %v54
    %64 = vmatprep.subr.bf16.mxu0 0
    %65 = vmatpush1.bf16.msra.mxu0 %v55
    %66 = vmatprep.subr.bf16.mxu0 0
    %67 = vmatpush1.bf16.msra.mxu0 0
    %68 = vmatprep.subr.bf16.mxu0 0
    %69 = vmatpush1.bf16.msra.mxu0 0
    %70 = vmatprep.subr.bf16.mxu0 0
    %71 = vmatpush1.bf16.msra.mxu0 0
    %72 = vmatprep.subr.bf16.mxu0 0
    %73 = vmatpush1.bf16.msra.mxu0 0
    %74 = vmatprep.subr.bf16.mxu0 0
    %75 = vmatpush1.bf16.msra.mxu0 0
    %76 = vmatprep.subr.bf16.mxu0 0
    %77 = vmatpush1.bf16.msra.mxu0 0
    %78 = vmatprep.subr.bf16.mxu0 0
    %79 = vmatpush1.bf16.msra.mxu0 0
    %80 = vmatprep.subr.bf16.mxu0 0
    %81 = vmatpush1.bf16.msra.mxu0 0
    %82 = vmatprep.subr.bf16.mxu0 0
    %83 = vmatpush1.bf16.msra.mxu0 0
    %84 = vmatprep.subr.bf16.mxu0 0
    %85 = vmatpush1.bf16.msra.mxu0 0
    %86 = vmatprep.subr.bf16.mxu0 0
    %87 = vmatpush1.bf16.msra.mxu0 0
    %88 = vmatprep.subr.bf16.mxu0 0
    %89 = vmatpush1.bf16.msra.mxu0 0
    %90 = vmatprep.subr.bf16.mxu0 0
    %91 = vmatpush1.bf16.msra.mxu0 0
    %92 = vmatprep.subr.bf16.mxu0 0
    %93 = vmatpush1.bf16.msra.mxu0 0
    %94 = vmatprep.mubr.bf16.mxu0 0
    %95 = vmatmul.mubr.bf16.gmra.mrb[0].mxu0 %v60
    %v96 = vpop.f32.mrb[0].mxu0
    %v97 = vadd.f32 %v39, %v96
    %v98 = vpop.f32.mrb[0].mxu0
    %v99 = vpop.f32.mrb[0].mxu0
    %v100 = vadd.f32 %v39, %v99
    %v101 = vpop.f32.mrb[0].mxu0
    %102 = vdwg.mxu0
    %v103 = vadd.f32 %v97, %v100
    %v104 = vrot.slane %v103, 4
    %v105 = vadd.f32 %v103, %v104
    %v106 = vrot.slane %v105, 2
    %v107 = vadd.f32 %v105, %v106
    %v108 = vrot.slane %v107, 1
    %v109 = vadd.f32 %v107, %v108
    %v110 = vrcp.pop 16.0
    %v111 = vmul.f32 %v109, %v110
    %v112 = vmul.f32 %v97, %v97
    %v113 = vmul.f32 %v100, %v100
    %v114 = vadd.f32 %v112, %v113
    %v115 = vrot.slane %v114, 4
    %v116 = vadd.f32 %v114, %v115
    %v117 = vrot.slane %v116, 2
    %v118 = vadd.f32 %v116, %v117
    %v119 = vrot.slane %v118, 1
    %v120 = vadd.f32 %v118, %v119
    %v121 = vmul.f32 %v120, %v110
    %v122 = vmul.f32 %v111, %v111
    %v123 = vsub.f32 %v121, %v122
    %v124 = vsub.f32 %v97, %v111
    %v125 = vsub.f32 %v100, %v111
    %v126 = vadd.f32 %v123, 1e-05
    %v127 = vrsqrt.pop %v126
    %v128 = vmul.f32 %v124, %v127
    %v129 = vmul.f32 %v125, %v127
    %v130 = vld [vmem:[%s3] sm:$0x1]
    %v132 = vlaneseq
    %v133 = vshrl.u32 %v132, 7
    %v134 = vsub.s32 0, %v133
    %v135 = vrot.slane %v130, %v134
    %v137 = vmul.f32 %v128, %v135
    %v138 = vmul.f32 %v129, %v135
    %v139 = vld [vmem:[%s4] sm:$0x1]
    %v141 = vlaneseq
    %v142 = vshrl.u32 %v141, 7
    %v143 = vsub.s32 0, %v142
    %v144 = vrot.slane %v139, %v143
    %v146 = vadd.f32 %v137, %v144
    %v147 = vadd.f32 %v138, %v144
    %v148 = vmax.f32 %v146, 0.0
    %v149 = vmax.f32 %v147, 0.0
    %v150 = vpack.c.bf16 %v149, %v148
    %v151 = vld [vmem:[%s5] sm:$0xf]
    %v152 = vld [vmem:[%s5 + $0x4] sm:$0xf]
    %v153 = vld [vmem:[%s5 + $0x8] sm:$0xf]
    %v154 = vld [vmem:[%s5 + $0xc] sm:$0xf]
    %v155 = vld [vmem:[%s5 + $0x10] sm:$0xf]
    %v156 = vld [vmem:[%s5 + $0x14] sm:$0xf]
    %v157 = vld [vmem:[%s5 + $0x18] sm:$0xf]
    %v158 = vld [vmem:[%s5 + $0x1c] sm:$0xf]
    %v159 = vld [vmem:[%s5 + $0x20] sm:$0xf]
    %v160 = vld [vmem:[%s5 + $0x24] sm:$0xf]
    %v161 = vld [vmem:[%s5 + $0x28] sm:$0xf]
    %v162 = vld [vmem:[%s5 + $0x2c] sm:$0xf]
    %v163 = vld [vmem:[%s5 + $0x30] sm:$0xf]
    %v164 = vld [vmem:[%s5 + $0x34] sm:$0xf]
    %v165 = vld [vmem:[%s5 + $0x38] sm:$0xf]
    %v166 = vld [vmem:[%s5 + $0x3c] sm:$0xf]
    %v167 = vld [vmem:[%s6] sm:$0x1]
    %v169 = vlaneseq
    %v170 = vshrl.u32 %v169, 7
    %v171 = vsub.s32 0, %v170
    %v172 = vrot.slane %v167, %v171
    %v190 = vunpack.c.l.b16 %v151
    %v191 = vunpack.c.l.b16 %v152
    %v192 = vunpack.c.l.b16 %v153
    %v193 = vunpack.c.l.b16 %v154
    %v194 = vunpack.c.l.b16 %v155
    %v195 = vunpack.c.l.b16 %v156
    %v196 = vunpack.c.l.b16 %v157
    %v197 = vunpack.c.l.b16 %v158
    %v198 = vunpack.c.l.b16 %v159
    %v199 = vunpack.c.l.b16 %v160
    %v200 = vunpack.c.l.b16 %v161
    %v201 = vunpack.c.l.b16 %v162
    %v202 = vunpack.c.l.b16 %v163
    %v203 = vunpack.c.l.b16 %v164
    %v204 = vunpack.c.l.b16 %v165
    %v205 = vunpack.c.l.b16 %v166
    %v206 = vpack.c.b16 %v191, %v190
    %v207 = vpack.c.b16 %v193, %v192
    %v208 = vpack.c.b16 %v195, %v194
    %v209 = vpack.c.b16 %v197, %v196
    %v210 = vpack.c.b16 %v199, %v198
    %v211 = vpack.c.b16 %v201, %v200
    %v212 = vpack.c.b16 %v203, %v202
    %v213 = vpack.c.b16 %v205, %v204
    %222 = vmatprep.subr.bf16.mxu0 0
    %223 = vmatpush1.bf16.msra.mxu0 %v206
    %224 = vmatprep.subr.bf16.mxu0 0
    %225 = vmatpush1.bf16.msra.mxu0 %v207
    %226 = vmatprep.subr.bf16.mxu0 0
    %227 = vmatpush1.bf16.msra.mxu0 %v208
    %228 = vmatprep.subr.bf16.mxu0 0
    %229 = vmatpush1.bf16.msra.mxu0 %v209
    %230 = vmatprep.subr.bf16.mxu0 0
    %231 = vmatpush1.bf16.msra.mxu0 %v210
    %232 = vmatprep.subr.bf16.mxu0 0
    %233 = vmatpush1.bf16.msra.mxu0 %v211
    %234 = vmatprep.subr.bf16.mxu0 0
    %235 = vmatpush1.bf16.msra.mxu0 %v212
    %236 = vmatprep.subr.bf16.mxu0 0
    %237 = vmatpush1.bf16.msra.mxu0 %v213
    %238 = vmatprep.subr.bf16.mxu0 0
    %239 = vmatpush1.bf16.msra.mxu0 0
    %240 = vmatprep.subr.bf16.mxu0 0
    %241 = vmatpush1.bf16.msra.mxu0 0
    %242 = vmatprep.subr.bf16.mxu0 0
    %243 = vmatpush1.bf16.msra.mxu0 0
    %244 = vmatprep.subr.bf16.mxu0 0
    %245 = vmatpush1.bf16.msra.mxu0 0
    %246 = vmatprep.subr.bf16.mxu0 0
    %247 = vmatpush1.bf16.msra.mxu0 0
    %248 = vmatprep.subr.bf16.mxu0 0
    %249 = vmatpush1.bf16.msra.mxu0 0
    %250 = vmatprep.subr.bf16.mxu0 0
    %251 = vmatpush1.bf16.msra.mxu0 0
    %252 = vmatprep.subr.bf16.mxu0 0
    %253 = vmatpush1.bf16.msra.mxu0 0
    %254 = vmatprep.mubr.bf16.mxu0 0
    %255 = vmatmul.mubr.bf16.gmra.mrb[0].mxu0 %v150
    %v256 = vpop.f32.mrb[0].mxu0
    %v257 = vadd.f32 %v172, %v256
    %v258 = vpop.f32.mrb[0].mxu0
    %v259 = vpop.f32.mrb[0].mxu0
    %v260 = vadd.f32 %v172, %v259
    %v261 = vpop.f32.mrb[0].mxu0
    %262 = vdwg.mxu0
    %263 = vst.msk [vmem:[#allocation2] sm:$0xff] %vm58, %v257
    %264 = vst.msk [vmem:[#allocation2 + $0x8] sm:$0xff] %vm58, %v260
    // Predicated region
    $region30: #{tpu_custom_call.1} parent=1 // pred_check
      _
    $region31: #{tpu_custom_call.1} parent=1 // pred_check_branch
      %266 = sbr.rel (0) target = $region33
    $region32: #{tpu_custom_call.1} parent=1 // pred_region
      %s268 = ssub.s32 256, 256
      %269 = vsyncadd [#allocation3], %s268
      %s270 = sshll.u32 [#allocation2], 4
      %s271 = int_to_ptr.vmem [resolvable:$true] %s270
      %276 = dma.vmem_to_hbm [thread:$0]  %s271, 256, %s7, [#allocation3], 128, 128, 8
    $region33: #{tpu_custom_call.1} parent=1 // pred_fallthru
      _
    // Predicated region
    $region34: #{tpu_custom_call.1} parent=1 // pred_check
      _
    $region35: #{tpu_custom_call.1} parent=1 // pred_check_branch
      %278 = sbr.rel (0) target = $region37
    $region36: #{tpu_custom_call.1} parent=1 // pred_region
      %279 = dma.done [#allocation3], 256
    $region37: #{tpu_custom_call.1} parent=1 // pred_fallthru
      _
    %280 = vsyncpa [#allocation3], 1

</llo_original>
